<compile_context>
chip_gen: v7x
topology: tpu7x:2x2x1
jax: 0.10.0
libtpu: 0.0.40
codegen_flags: <defaults>
</compile_context>

<pallas_src>
import functools

import jax
import jax.numpy as jnp
from jax.experimental import pallas as pl
from jax.experimental.pallas import tpu as pltpu


def _label_smoothing_kernel(pred_ref, tgt_ref, out_ref, *, classes, smoothing,
                            n_rows, tile_n):
    confidence = 1.0 - smoothing
    smooth_val = smoothing / (classes - 1)

    x = pred_ref[...].astype(jnp.float32)        # (tile_n, C); upcast if bf16 input
    tgt = tgt_ref[...]                           # (tile_n, 1) int32

    # Row-wise logsumexp (exp on EUP; max/sum are cross-lane reductions).
    m = jnp.max(x, axis=-1, keepdims=True)
    lse = jnp.log(jnp.sum(jnp.exp(x - m), axis=-1, keepdims=True)) + m

    # Row sum of logits and the gathered logit at the target class.
    sum_x = jnp.sum(x, axis=-1, keepdims=True)
    col = jax.lax.broadcasted_iota(jnp.int32, x.shape, 1)
    x_tgt = jnp.sum(jnp.where(col == tgt, x, 0.0), axis=-1, keepdims=True)

    # Closed form of sum(-true_dist * log_softmax(x)) per row.
    loss = lse - (smooth_val * sum_x + (confidence - smooth_val) * x_tgt)

    # Mask rows beyond the true batch size (partial final tile reads garbage).
    row = pl.program_id(0) * tile_n + jax.lax.broadcasted_iota(
        jnp.int32, (tile_n, 1), 0)
    loss = jnp.where(row < n_rows, loss, 0.0)

    # One f32 partial sum per tile, written to SMEM (no masked VMEM store).
    out_ref[0, 0] = jnp.sum(loss)


def _choose_tile_n(n, c, itemsize, budget_bytes=4 * 1024 * 1024, max_rows=2048):
    """Rows per batch tile: multiple of 128, bounded by a per-buffer VMEM budget."""
    rows_by_budget = max(128, (budget_bytes // max(1, itemsize * c)) // 128 * 128)
    n_pad = ((n + 127) // 128) * 128
    return int(min(rows_by_budget, n_pad, max_rows))


def label_smoothing_loss(pred, target, *, classes=5, smoothing=0.0,
                         block_rows=None):
    """pred: (N, C) float32/bfloat16, target: (N,) int -> scalar float32 loss."""
    n, c = pred.shape
    assert c == classes
    assert classes >= 2, "label smoothing needs at least 2 classes"

    itemsize = jnp.dtype(pred.dtype).itemsize
    tile_n = block_rows if block_rows is not None else _choose_tile_n(n, c, itemsize)
    num_tiles = pl.cdiv(n, tile_n)

    tgt2d = target.astype(jnp.int32).reshape(n, 1)

    kernel = functools.partial(
        _label_smoothing_kernel,
        classes=classes, smoothing=float(smoothing), n_rows=n, tile_n=tile_n)

    cost = pl.CostEstimate(
        flops=6 * n * c,
        transcendentals=n * c + n,
        bytes_accessed=int(n * c * itemsize + n * 4 + num_tiles * 4),
    )

    partials = pl.pallas_call(
        kernel,
        out_shape=jax.ShapeDtypeStruct((num_tiles, 1), jnp.float32),
        grid=(num_tiles,),
        in_specs=[
            pl.BlockSpec((tile_n, c), lambda i: (i, 0)),   # streamed pred tile
            pl.BlockSpec((tile_n, 1), lambda i: (i, 0)),   # per-row targets
        ],
        out_specs=pl.BlockSpec((1, 1), lambda i: (i, 0),
                               memory_space=pltpu.MemorySpace.SMEM),
        compiler_params=pltpu.CompilerParams(
            dimension_semantics=("parallel",),
            vmem_limit_bytes=32 * 1024 * 1024,
        ),
        cost_estimate=cost,
    )(pred, tgt2d)

    # Accumulated as f32 per-tile sums; divide by the true N once at the end.
    return jnp.sum(partials) / jnp.float32(n)


def _reference(pred, target, *, classes=5, smoothing=0.0):
    confidence = 1.0 - smoothing
    logp = jax.nn.log_softmax(pred, axis=-1)
    true_dist = jnp.full_like(logp, smoothing / (classes - 1))
    true_dist = true_dist.at[jnp.arange(pred.shape[0]), target].set(confidence)
    return jnp.mean(jnp.sum(-true_dist * logp, axis=-1))


if __name__ == "__main__":
    classes = 5
    smoothing = 0.1
    key = jax.random.PRNGKey(0)

    # Small demo shape (single partial tile).
    k1, k2 = jax.random.split(jax.random.fold_in(key, 0))
    pred = jax.random.normal(k1, (8, classes), dtype=jnp.float32)
    target = jax.random.randint(k2, (8,), 0, classes, dtype=jnp.int32)
    loss = label_smoothing_loss(pred, target, classes=classes, smoothing=smoothing)
    loss = jax.block_until_ready(loss)
    ref = _reference(pred, target, classes=classes, smoothing=smoothing)
    assert jnp.allclose(loss, ref, atol=1e-5, rtol=1e-5), (loss, ref)

    # Multi-tile path with a partial last tile (exercises in-kernel row masking).
    k3, k4 = jax.random.split(jax.random.fold_in(key, 1))
    pred2 = jax.random.normal(k3, (300, classes), dtype=jnp.float32)
    target2 = jax.random.randint(k4, (300,), 0, classes, dtype=jnp.int32)
    loss2 = label_smoothing_loss(pred2, target2, classes=classes,
                                 smoothing=smoothing, block_rows=128)
    loss2 = jax.block_until_ready(loss2)
    ref2 = _reference(pred2, target2, classes=classes, smoothing=smoothing)
    assert jnp.allclose(loss2, ref2, atol=1e-5, rtol=1e-5), (loss2, ref2)

    print("KERNEL_OK")
</pallas_src>

<mosaic_0001>
module attributes {stable_mosaic.version = 11 : i64} {
  func.func @_label_smoothing_kernel(%arg0: i32, %arg1: memref<128x5xf32, #tpu.memory_space<vmem>>, %arg2: memref<128x1xi32, #tpu.memory_space<vmem>>, %arg3: memref<1x1xf32, #tpu.memory_space<smem>>) attributes {dimension_semantics = [#tpu.dimension_semantics<parallel>], iteration_bounds = array<i64: 1>, scalar_prefetch = 0 : i64, scratch_operands = 0 : i64, tpu.core_type = #tpu.core_type<tc>, window_params = [{transform_indices = @transform_0, window_bounds = array<i64: 128, 5>}, {transform_indices = @transform_1, window_bounds = array<i64: 128, 1>}, {transform_indices = @transform_2, window_bounds = array<i64: 1, 1>}]} {
    %c0 = arith.constant 0 : index
    %c0_0 = arith.constant 0 : index
    %0 = vector.load %arg1[%c0, %c0_0] : memref<128x5xf32, #tpu.memory_space<vmem>>, vector<128x5xf32>
    %c0_1 = arith.constant 0 : index
    %c0_2 = arith.constant 0 : index
    %1 = vector.load %arg2[%c0_1, %c0_2] : memref<128x1xi32, #tpu.memory_space<vmem>>, vector<128x1xi32>
    %cst = arith.constant dense<0xFF800000> : vector<128xf32>
    %2 = vector.multi_reduction <maximumf>, %0, %cst [1] : vector<128x5xf32> to vector<128xf32>
    %3 = vector.shape_cast %2 : vector<128xf32> to vector<128x1xf32>
    %4 = vector.broadcast %3 : vector<128x1xf32> to vector<128x5xf32>
    %5 = arith.subf %0, %4 : vector<128x5xf32>
    %6 = math.exp %5 : vector<128x5xf32>
    %cst_3 = arith.constant dense<0.000000e+00> : vector<128xf32>
    %7 = vector.multi_reduction <add>, %6, %cst_3 [1] : vector<128x5xf32> to vector<128xf32>
    %8 = vector.shape_cast %7 : vector<128xf32> to vector<128x1xf32>
    %9 = math.log %8 : vector<128x1xf32>
    %10 = arith.addf %9, %3 : vector<128x1xf32>
    %cst_4 = arith.constant dense<0.000000e+00> : vector<128xf32>
    %11 = vector.multi_reduction <add>, %0, %cst_4 [1] : vector<128x5xf32> to vector<128xf32>
    %12 = vector.shape_cast %11 : vector<128xf32> to vector<128x1xf32>
    %13 = tpu.iota {dimensions = array<i32: 1>} : vector<128x5xi32>
    %14 = vector.broadcast %1 : vector<128x1xi32> to vector<128x5xi32>
    %15 = arith.cmpi eq, %13, %14 : vector<128x5xi32>
    %cst_5 = arith.constant 0.000000e+00 : f32
    %16 = vector.broadcast %cst_5 : f32 to vector<128x5xf32>
    %17 = arith.select %15, %0, %16 : vector<128x5xi1>, vector<128x5xf32>
    %cst_6 = arith.constant dense<0.000000e+00> : vector<128xf32>
    %18 = vector.multi_reduction <add>, %17, %cst_6 [1] : vector<128x5xf32> to vector<128xf32>
    %19 = vector.shape_cast %18 : vector<128xf32> to vector<128x1xf32>
    %cst_7 = arith.constant 2.500000e-02 : f32
    %20 = vector.broadcast %cst_7 : f32 to vector<128x1xf32>
    %21 = arith.mulf %20, %12 : vector<128x1xf32>
    %cst_8 = arith.constant 8.750000e-01 : f32
    %22 = vector.broadcast %cst_8 : f32 to vector<128x1xf32>
    %23 = arith.mulf %22, %19 : vector<128x1xf32>
    %24 = arith.addf %21, %23 : vector<128x1xf32>
    %25 = arith.subf %10, %24 : vector<128x1xf32>
    %c128_i32 = arith.constant 128 : i32
    %26 = arith.muli %arg0, %c128_i32 : i32
    %27 = tpu.iota {dimensions = array<i32: 0>} : vector<128x1xi32>
    %28 = vector.broadcast %26 : i32 to vector<128x1xi32>
    %29 = arith.addi %28, %27 : vector<128x1xi32>
    %c8_i32 = arith.constant 8 : i32
    %30 = vector.broadcast %c8_i32 : i32 to vector<128x1xi32>
    %31 = arith.cmpi slt, %29, %30 : vector<128x1xi32>
    %cst_9 = arith.constant 0.000000e+00 : f32
    %32 = vector.broadcast %cst_9 : f32 to vector<128x1xf32>
    %33 = arith.select %31, %25, %32 : vector<128x1xi1>, vector<128x1xf32>
    %34 = vector.shape_cast %33 : vector<128x1xf32> to vector<1x128x1xf32>
    %cst_10 = arith.constant dense<0.000000e+00> : vector<1xf32>
    %35 = vector.multi_reduction <add>, %34, %cst_10 [1, 2] : vector<1x128x1xf32> to vector<1xf32>
    %36 = vector.shape_cast %35 : vector<1xf32> to vector<1x1x1xf32>
    %37 = vector.extract %36[0, 0, 0] : f32 from vector<1x1x1xf32>
    %c0_11 = arith.constant 0 : index
    %c0_12 = arith.constant 0 : index
    %38 = memref.load %arg3[%c0_11, %c0_12] : memref<1x1xf32, #tpu.memory_space<smem>>
    memref.store %37, %arg3[%c0_11, %c0_12] : memref<1x1xf32, #tpu.memory_space<smem>>
    return
  }
  func.func @transform_0(%arg0: i32) -> (i32, i32) {
    %c0_i32 = arith.constant 0 : i32
    %c0_i32_0 = arith.constant 0 : i32
    return %arg0, %c0_i32 : i32, i32
  }
  func.func @transform_1(%arg0: i32) -> (i32, i32) {
    %c0_i32 = arith.constant 0 : i32
    %c0_i32_0 = arith.constant 0 : i32
    return %arg0, %c0_i32 : i32, i32
  }
  func.func @transform_2(%arg0: i32) -> (i32, i32) {
    %c0_i32 = arith.constant 0 : i32
    %c0_i32_0 = arith.constant 0 : i32
    return %arg0, %c0_i32 : i32, i32
  }
}

</mosaic_0001>

<llo_original>
// kernel: tpu_custom_call.1
$region0: #{tpu_custom_call.1}
  #allocation0 [shape = 'u32[]', space=smem, size = 0x4, offset = 0x4, fixed_abs, tag = 'smem constant byte address 0x4 - core index']
  #allocation1 [shape = 'u32[144,128]{1,0:T(1,128)}', space=vmem, size = 0x12000, scoped, tag = 'internal scratch']
  %s0 = inlined_call_operand.vmem [shape: f32[8,5], index: 0, kind: input, shape index: {}]
  %s1 = inlined_call_operand.vmem [shape: s32[8,1], index: 1, kind: input, shape index: {}]
  %s2 = inlined_call_operand.hbm [shape: f32[1,1], index: 2, kind: output, shape index: {}]
  %s3 = sld [smem:[#allocation0]]
  $region18: #{tpu_custom_call.1} parent=0
    _
  %s5 = ssub.s32 1, %s3
  %s6 = scalar_select 0, %s5, %s3
  $region1: #{tpu_custom_call.1} parent=0
    #allocation2 [shape = 'u8[512]{0}', space=smem, size = 0x200, scoped, tag = 'output window, operand 0, single buffered']
    #allocation3 [shape = 's32[1]{0}', space=sflag, size = 0x4, scoped, tag = 'scoped memory for tpu_custom_call.1']
    %7 = vsyncpa [#allocation3], 0
    // Predicated region
    $region2: #{tpu_custom_call.1} parent=1 // pred_check
      _
    $region3: #{tpu_custom_call.1} parent=1 // pred_check_branch
      %9 = sbr.rel (0) target = $region5
    $region4: #{tpu_custom_call.1} parent=1 // pred_region
      _
    $region5: #{tpu_custom_call.1} parent=1 // pred_fallthru
      _
    // Predicated region
    $region6: #{tpu_custom_call.1} parent=1 // pred_check
      _
    $region7: #{tpu_custom_call.1} parent=1 // pred_check_branch
      %11 = sbr.rel (0) target = $region9
    $region8: #{tpu_custom_call.1} parent=1 // pred_region
      _
    $region9: #{tpu_custom_call.1} parent=1 // pred_fallthru
      _
    %v12 = vld [vmem:[%s0] sm:$0xff]
    %v13 = vld [vmem:[%s0 + $0x8] sm:$0xff]
    %v14 = vld [vmem:[%s0 + $0x10] sm:$0xff]
    %v15 = vld [vmem:[%s0 + $0x18] sm:$0xff]
    %v16 = vld [vmem:[%s0 + $0x20] sm:$0xff]
    %v17 = vld [vmem:[%s0 + $0x28] sm:$0xff]
    %v18 = vld [vmem:[%s0 + $0x30] sm:$0xff]
    %v19 = vld [vmem:[%s0 + $0x38] sm:$0xff]
    %v20 = vld [vmem:[%s0 + $0x40] sm:$0xff]
    %v21 = vld [vmem:[%s0 + $0x48] sm:$0xff]
    %v22 = vld [vmem:[%s0 + $0x50] sm:$0xff]
    %v23 = vld [vmem:[%s0 + $0x58] sm:$0xff]
    %v24 = vld [vmem:[%s0 + $0x60] sm:$0xff]
    %v25 = vld [vmem:[%s0 + $0x68] sm:$0xff]
    %v26 = vld [vmem:[%s0 + $0x70] sm:$0xff]
    %v27 = vld [vmem:[%s0 + $0x78] sm:$0xff]
    %v28 = vld [vmem:[%s1] sm:$0xff]
    %v29 = vld [vmem:[%s1 + $0x8] sm:$0xff]
    %v30 = vld [vmem:[%s1 + $0x10] sm:$0xff]
    %v31 = vld [vmem:[%s1 + $0x18] sm:$0xff]
    %v32 = vld [vmem:[%s1 + $0x20] sm:$0xff]
    %v33 = vld [vmem:[%s1 + $0x28] sm:$0xff]
    %v34 = vld [vmem:[%s1 + $0x30] sm:$0xff]
    %v35 = vld [vmem:[%s1 + $0x38] sm:$0xff]
    %v36 = vld [vmem:[%s1 + $0x40] sm:$0xff]
    %v37 = vld [vmem:[%s1 + $0x48] sm:$0xff]
    %v38 = vld [vmem:[%s1 + $0x50] sm:$0xff]
    %v39 = vld [vmem:[%s1 + $0x58] sm:$0xff]
    %v40 = vld [vmem:[%s1 + $0x60] sm:$0xff]
    %v41 = vld [vmem:[%s1 + $0x68] sm:$0xff]
    %v42 = vld [vmem:[%s1 + $0x70] sm:$0xff]
    %v43 = vld [vmem:[%s1 + $0x78] sm:$0xff]
    %vm44 = vcmask 39936
    %v45 = vsel %vm44, %v12, -inf
    %46 = vmax.xlane.f32.xlu0 %v45
    %v47 = vpop.xlane.xlu0 %46
    %v48 = vsel %vm44, %v13, -inf
    %49 = vmax.xlane.f32.xlu0 %v48
    %v50 = vpop.xlane.xlu0 %49
    %v51 = vsel %vm44, %v14, -inf
    %52 = vmax.xlane.f32.xlu0 %v51
    %v53 = vpop.xlane.xlu0 %52
    %v54 = vsel %vm44, %v15, -inf
    %55 = vmax.xlane.f32.xlu0 %v54
    %v56 = vpop.xlane.xlu0 %55
    %v57 = vsel %vm44, %v16, -inf
    %58 = vmax.xlane.f32.xlu0 %v57
    %v59 = vpop.xlane.xlu0 %58
    %v60 = vsel %vm44, %v17, -inf
    %61 = vmax.xlane.f32.xlu0 %v60
    %v62 = vpop.xlane.xlu0 %61
    %v63 = vsel %vm44, %v18, -inf
    %64 = vmax.xlane.f32.xlu0 %v63
    %v65 = vpop.xlane.xlu0 %64
    %v66 = vsel %vm44, %v19, -inf
    %67 = vmax.xlane.f32.xlu0 %v66
    %v68 = vpop.xlane.xlu0 %67
    %v69 = vsel %vm44, %v20, -inf
    %70 = vmax.xlane.f32.xlu0 %v69
    %v71 = vpop.xlane.xlu0 %70
    %v72 = vsel %vm44, %v21, -inf
    %73 = vmax.xlane.f32.xlu0 %v72
    %v74 = vpop.xlane.xlu0 %73
    %v75 = vsel %vm44, %v22, -inf
    %76 = vmax.xlane.f32.xlu0 %v75
    %v77 = vpop.xlane.xlu0 %76
    %v78 = vsel %vm44, %v23, -inf
    %79 = vmax.xlane.f32.xlu0 %v78
    %v80 = vpop.xlane.xlu0 %79
    %v81 = vsel %vm44, %v24, -inf
    %82 = vmax.xlane.f32.xlu0 %v81
    %v83 = vpop.xlane.xlu0 %82
    %v84 = vsel %vm44, %v25, -inf
    %85 = vmax.xlane.f32.xlu0 %v84
    %v86 = vpop.xlane.xlu0 %85
    %v87 = vsel %vm44, %v26, -inf
    %88 = vmax.xlane.f32.xlu0 %v87
    %v89 = vpop.xlane.xlu0 %88
    %v90 = vsel %vm44, %v27, -inf
    %91 = vmax.xlane.f32.xlu0 %v90
    %v92 = vpop.xlane.xlu0 %91
    %v93 = vsub.f32 %v12, %v47
    %v94 = vsub.f32 %v13, %v50
    %v95 = vsub.f32 %v14, %v53
    %v96 = vsub.f32 %v15, %v56
    %v97 = vsub.f32 %v16, %v59
    %v98 = vsub.f32 %v17, %v62
    %v99 = vsub.f32 %v18, %v65
    %v100 = vsub.f32 %v19, %v68
    %v101 = vsub.f32 %v20, %v71
    %v102 = vsub.f32 %v21, %v74
    %v103 = vsub.f32 %v22, %v77
    %v104 = vsub.f32 %v23, %v80
    %v105 = vsub.f32 %v24, %v83
    %v106 = vsub.f32 %v25, %v86
    %v107 = vsub.f32 %v26, %v89
    %v108 = vsub.f32 %v27, %v92
    %v109 = vmul.f32 %v93, 1.442695
    %v110 = vpow.pop %v109
    %v111 = vmul.f32 %v94, 1.442695
    %v112 = vpow.pop %v111
    %v113 = vmul.f32 %v95, 1.442695
    %v114 = vpow.pop %v113
    %v115 = vmul.f32 %v96, 1.442695
    %v116 = vpow.pop %v115
    %v117 = vmul.f32 %v97, 1.442695
    %v118 = vpow.pop %v117
    %v119 = vmul.f32 %v98, 1.442695
    %v120 = vpow.pop %v119
    %v121 = vmul.f32 %v99, 1.442695
    %v122 = vpow.pop %v121
    %v123 = vmul.f32 %v100, 1.442695
    %v124 = vpow.pop %v123
    %v125 = vmul.f32 %v101, 1.442695
    %v126 = vpow.pop %v125
    %v127 = vmul.f32 %v102, 1.442695
    %v128 = vpow.pop %v127
    %v129 = vmul.f32 %v103, 1.442695
    %v130 = vpow.pop %v129
    %v131 = vmul.f32 %v104, 1.442695
    %v132 = vpow.pop %v131
    %v133 = vmul.f32 %v105, 1.442695
    %v134 = vpow.pop %v133
    %v135 = vmul.f32 %v106, 1.442695
    %v136 = vpow.pop %v135
    %v137 = vmul.f32 %v107, 1.442695
    %v138 = vpow.pop %v137
    %v139 = vmul.f32 %v108, 1.442695
    %v140 = vpow.pop %v139
    %v141 = vsel %vm44, %v110, 0.0
    %142 = vadd.xlane.f32.xlu0 %v141
    %v143 = vpop.xlane.xlu0 %142
    %v144 = vsel %vm44, %v112, 0.0
    %145 = vadd.xlane.f32.xlu0 %v144
    %v146 = vpop.xlane.xlu0 %145
    %v147 = vsel %vm44, %v114, 0.0
    %148 = vadd.xlane.f32.xlu0 %v147
    %v149 = vpop.xlane.xlu0 %148
    %v150 = vsel %vm44, %v116, 0.0
    %151 = vadd.xlane.f32.xlu0 %v150
    %v152 = vpop.xlane.xlu0 %151
    %v153 = vsel %vm44, %v118, 0.0
    %154 = vadd.xlane.f32.xlu0 %v153
    %v155 = vpop.xlane.xlu0 %154
    %v156 = vsel %vm44, %v120, 0.0
    %157 = vadd.xlane.f32.xlu0 %v156
    %v158 = vpop.xlane.xlu0 %157
    %v159 = vsel %vm44, %v122, 0.0
    %160 = vadd.xlane.f32.xlu0 %v159
    %v161 = vpop.xlane.xlu0 %160
    %v162 = vsel %vm44, %v124, 0.0
    %163 = vadd.xlane.f32.xlu0 %v162
    %v164 = vpop.xlane.xlu0 %163
    %v165 = vsel %vm44, %v126, 0.0
    %166 = vadd.xlane.f32.xlu0 %v165
    %v167 = vpop.xlane.xlu0 %166
    %v168 = vsel %vm44, %v128, 0.0
    %169 = vadd.xlane.f32.xlu0 %v168
    %v170 = vpop.xlane.xlu0 %169
    %v171 = vsel %vm44, %v130, 0.0
    %172 = vadd.xlane.f32.xlu0 %v171
    %v173 = vpop.xlane.xlu0 %172
    %v174 = vsel %vm44, %v132, 0.0
    %175 = vadd.xlane.f32.xlu0 %v174
    %v176 = vpop.xlane.xlu0 %175
    %v177 = vsel %vm44, %v134, 0.0
    %178 = vadd.xlane.f32.xlu0 %v177
    %v179 = vpop.xlane.xlu0 %178
    %v180 = vsel %vm44, %v136, 0.0
    %181 = vadd.xlane.f32.xlu0 %v180
    %v182 = vpop.xlane.xlu0 %181
    %v183 = vsel %vm44, %v138, 0.0
    %184 = vadd.xlane.f32.xlu0 %v183
    %v185 = vpop.xlane.xlu0 %184
    %v186 = vsel %vm44, %v140, 0.0
    %187 = vadd.xlane.f32.xlu0 %v186
    %v188 = vpop.xlane.xlu0 %187
    %v189 = vlog2.pop %v143
    %v190 = vmul.f32 %v189, 0.6931472
    %v191 = vlog2.pop %v146
    %v192 = vmul.f32 %v191, 0.6931472
    %v193 = vlog2.pop %v149
    %v194 = vmul.f32 %v193, 0.6931472
    %v195 = vlog2.pop %v152
    %v196 = vmul.f32 %v195, 0.6931472
    %v197 = vlog2.pop %v155
    %v198 = vmul.f32 %v197, 0.6931472
    %v199 = vlog2.pop %v158
    %v200 = vmul.f32 %v199, 0.6931472
    %v201 = vlog2.pop %v161
    %v202 = vmul.f32 %v201, 0.6931472
    %v203 = vlog2.pop %v164
    %v204 = vmul.f32 %v203, 0.6931472
    %v205 = vlog2.pop %v167
    %v206 = vmul.f32 %v205, 0.6931472
    %v207 = vlog2.pop %v170
    %v208 = vmul.f32 %v207, 0.6931472
    %v209 = vlog2.pop %v173
    %v210 = vmul.f32 %v209, 0.6931472
    %v211 = vlog2.pop %v176
    %v212 = vmul.f32 %v211, 0.6931472
    %v213 = vlog2.pop %v179
    %v214 = vmul.f32 %v213, 0.6931472
    %v215 = vlog2.pop %v182
    %v216 = vmul.f32 %v215, 0.6931472
    %v217 = vlog2.pop %v185
    %v218 = vmul.f32 %v217, 0.6931472
    %v219 = vlog2.pop %v188
    %v220 = vmul.f32 %v219, 0.6931472
    %v221 = vadd.f32 %v190, %v47
    %v222 = vadd.f32 %v192, %v50
    %v223 = vadd.f32 %v194, %v53
    %v224 = vadd.f32 %v196, %v56
    %v225 = vadd.f32 %v198, %v59
    %v226 = vadd.f32 %v200, %v62
    %v227 = vadd.f32 %v202, %v65
    %v228 = vadd.f32 %v204, %v68
    %v229 = vadd.f32 %v206, %v71
    %v230 = vadd.f32 %v208, %v74
    %v231 = vadd.f32 %v210, %v77
    %v232 = vadd.f32 %v212, %v80
    %v233 = vadd.f32 %v214, %v83
    %v234 = vadd.f32 %v216, %v86
    %v235 = vadd.f32 %v218, %v89
    %v236 = vadd.f32 %v220, %v92
    %v237 = vsel %vm44, %v12, 0.0
    %238 = vadd.xlane.f32.xlu0 %v237
    %v239 = vpop.xlane.xlu0 %238
    %v240 = vsel %vm44, %v13, 0.0
    %241 = vadd.xlane.f32.xlu0 %v240
    %v242 = vpop.xlane.xlu0 %241
    %v243 = vsel %vm44, %v14, 0.0
    %244 = vadd.xlane.f32.xlu0 %v243
    %v245 = vpop.xlane.xlu0 %244
    %v246 = vsel %vm44, %v15, 0.0
    %247 = vadd.xlane.f32.xlu0 %v246
    %v248 = vpop.xlane.xlu0 %247
    %v249 = vsel %vm44, %v16, 0.0
    %250 = vadd.xlane.f32.xlu0 %v249
    %v251 = vpop.xlane.xlu0 %250
    %v252 = vsel %vm44, %v17, 0.0
    %253 = vadd.xlane.f32.xlu0 %v252
    %v254 = vpop.xlane.xlu0 %253
    %v255 = vsel %vm44, %v18, 0.0
    %256 = vadd.xlane.f32.xlu0 %v255
    %v257 = vpop.xlane.xlu0 %256
    %v258 = vsel %vm44, %v19, 0.0
    %259 = vadd.xlane.f32.xlu0 %v258
    %v260 = vpop.xlane.xlu0 %259
    %v261 = vsel %vm44, %v20, 0.0
    %262 = vadd.xlane.f32.xlu0 %v261
    %v263 = vpop.xlane.xlu0 %262
    %v264 = vsel %vm44, %v21, 0.0
    %265 = vadd.xlane.f32.xlu0 %v264
    %v266 = vpop.xlane.xlu0 %265
    %v267 = vsel %vm44, %v22, 0.0
    %268 = vadd.xlane.f32.xlu0 %v267
    %v269 = vpop.xlane.xlu0 %268
    %v270 = vsel %vm44, %v23, 0.0
    %271 = vadd.xlane.f32.xlu0 %v270
    %v272 = vpop.xlane.xlu0 %271
    %v273 = vsel %vm44, %v24, 0.0
    %274 = vadd.xlane.f32.xlu0 %v273
    %v275 = vpop.xlane.xlu0 %274
    %v276 = vsel %vm44, %v25, 0.0
    %277 = vadd.xlane.f32.xlu0 %v276
    %v278 = vpop.xlane.xlu0 %277
    %v279 = vsel %vm44, %v26, 0.0
    %280 = vadd.xlane.f32.xlu0 %v279
    %v281 = vpop.xlane.xlu0 %280
    %v282 = vsel %vm44, %v27, 0.0
    %283 = vadd.xlane.f32.xlu0 %v282
    %v284 = vpop.xlane.xlu0 %283
    %v285 = vlaneseq
    %v286 = vand.u32 %v285, 127
    %287 = vset.pattern.permute.xlu0 0
    %288 = vperm.xlu0 %287, %v28
    %v289 = vpop.permute.xlu0 %288
    %290 = vset.pattern.permute.xlu0 0
    %291 = vperm.xlu0 %290, %v29
    %v292 = vpop.permute.xlu0 %291
    %293 = vset.pattern.permute.xlu0 0
    %294 = vperm.xlu0 %293, %v30
    %v295 = vpop.permute.xlu0 %294
    %296 = vset.pattern.permute.xlu0 0
    %297 = vperm.xlu0 %296, %v31
    %v298 = vpop.permute.xlu0 %297
    %299 = vset.pattern.permute.xlu0 0
    %300 = vperm.xlu0 %299, %v32
    %v301 = vpop.permute.xlu0 %300
    %302 = vset.pattern.permute.xlu0 0
    %303 = vperm.xlu0 %302, %v33
    %v304 = vpop.permute.xlu0 %303
    %305 = vset.pattern.permute.xlu0 0
    %306 = vperm.xlu0 %305, %v34
    %v307 = vpop.permute.xlu0 %306
    %308 = vset.pattern.permute.xlu0 0
    %309 = vperm.xlu0 %308, %v35
    %v310 = vpop.permute.xlu0 %309
    %311 = vset.pattern.permute.xlu0 0
    %312 = vperm.xlu0 %311, %v36
    %v313 = vpop.permute.xlu0 %312
    %314 = vset.pattern.permute.xlu0 0
    %315 = vperm.xlu0 %314, %v37
    %v316 = vpop.permute.xlu0 %315
    %317 = vset.pattern.permute.xlu0 0
    %318 = vperm.xlu0 %317, %v38
    %v319 = vpop.permute.xlu0 %318
    %320 = vset.pattern.permute.xlu0 0
    %321 = vperm.xlu0 %320, %v39
    %v322 = vpop.permute.xlu0 %321
    %323 = vset.pattern.permute.xlu0 0
    %324 = vperm.xlu0 %323, %v40
    %v325 = vpop.permute.xlu0 %324
    %326 = vset.pattern.permute.xlu0 0
    %327 = vperm.xlu0 %326, %v41
    %v328 = vpop.permute.xlu0 %327
    %329 = vset.pattern.permute.xlu0 0
    %330 = vperm.xlu0 %329, %v42
    %v331 = vpop.permute.xlu0 %330
    %332 = vset.pattern.permute.xlu0 0
    %333 = vperm.xlu0 %332, %v43
    %v334 = vpop.permute.xlu0 %333
    %vm335 = vcmp.eq.s32.totalorder %v286, %v289
    %vm336 = vcmp.eq.s32.totalorder %v286, %v292
    %vm337 = vcmp.eq.s32.totalorder %v286, %v295
    %vm338 = vcmp.eq.s32.totalorder %v286, %v298
    %vm339 = vcmp.eq.s32.totalorder %v286, %v301
    %vm340 = vcmp.eq.s32.totalorder %v286, %v304
    %vm341 = vcmp.eq.s32.totalorder %v286, %v307
    %vm342 = vcmp.eq.s32.totalorder %v286, %v310
    %vm343 = vcmp.eq.s32.totalorder %v286, %v313
    %vm344 = vcmp.eq.s32.totalorder %v286, %v316
    %vm345 = vcmp.eq.s32.totalorder %v286, %v319
    %vm346 = vcmp.eq.s32.totalorder %v286, %v322
    %vm347 = vcmp.eq.s32.totalorder %v286, %v325
    %vm348 = vcmp.eq.s32.totalorder %v286, %v328
    %vm349 = vcmp.eq.s32.totalorder %v286, %v331
    %vm350 = vcmp.eq.s32.totalorder %v286, %v334
    %v351 = vsel %vm335, %v12, 0.0
    %v352 = vsel %vm336, %v13, 0.0
    %v353 = vsel %vm337, %v14, 0.0
    %v354 = vsel %vm338, %v15, 0.0
    %v355 = vsel %vm339, %v16, 0.0
    %v356 = vsel %vm340, %v17, 0.0
    %v357 = vsel %vm341, %v18, 0.0
    %v358 = vsel %vm342, %v19, 0.0
    %v359 = vsel %vm343, %v20, 0.0
    %v360 = vsel %vm344, %v21, 0.0
    %v361 = vsel %vm345, %v22, 0.0
    %v362 = vsel %vm346, %v23, 0.0
    %v363 = vsel %vm347, %v24, 0.0
    %v364 = vsel %vm348, %v25, 0.0
    %v365 = vsel %vm349, %v26, 0.0
    %v366 = vsel %vm350, %v27, 0.0
    %v367 = vsel %vm44, %v351, 0.0
    %368 = vadd.xlane.f32.xlu0 %v367
    %v369 = vpop.xlane.xlu0 %368
    %v370 = vsel %vm44, %v352, 0.0
    %371 = vadd.xlane.f32.xlu0 %v370
    %v372 = vpop.xlane.xlu0 %371
    %v373 = vsel %vm44, %v353, 0.0
    %374 = vadd.xlane.f32.xlu0 %v373
    %v375 = vpop.xlane.xlu0 %374
    %v376 = vsel %vm44, %v354, 0.0
    %377 = vadd.xlane.f32.xlu0 %v376
    %v378 = vpop.xlane.xlu0 %377
    %v379 = vsel %vm44, %v355, 0.0
    %380 = vadd.xlane.f32.xlu0 %v379
    %v381 = vpop.xlane.xlu0 %380
    %v382 = vsel %vm44, %v356, 0.0
    %383 = vadd.xlane.f32.xlu0 %v382
    %v384 = vpop.xlane.xlu0 %383
    %v385 = vsel %vm44, %v357, 0.0
    %386 = vadd.xlane.f32.xlu0 %v385
    %v387 = vpop.xlane.xlu0 %386
    %v388 = vsel %vm44, %v358, 0.0
    %389 = vadd.xlane.f32.xlu0 %v388
    %v390 = vpop.xlane.xlu0 %389
    %v391 = vsel %vm44, %v359, 0.0
    %392 = vadd.xlane.f32.xlu0 %v391
    %v393 = vpop.xlane.xlu0 %392
    %v394 = vsel %vm44, %v360, 0.0
    %395 = vadd.xlane.f32.xlu0 %v394
    %v396 = vpop.xlane.xlu0 %395
    %v397 = vsel %vm44, %v361, 0.0
    %398 = vadd.xlane.f32.xlu0 %v397
    %v399 = vpop.xlane.xlu0 %398
    %v400 = vsel %vm44, %v362, 0.0
    %401 = vadd.xlane.f32.xlu0 %v400
    %v402 = vpop.xlane.xlu0 %401
    %v403 = vsel %vm44, %v363, 0.0
    %404 = vadd.xlane.f32.xlu0 %v403
    %v405 = vpop.xlane.xlu0 %404
    %v406 = vsel %vm44, %v364, 0.0
    %407 = vadd.xlane.f32.xlu0 %v406
    %v408 = vpop.xlane.xlu0 %407
    %v409 = vsel %vm44, %v365, 0.0
    %410 = vadd.xlane.f32.xlu0 %v409
    %v411 = vpop.xlane.xlu0 %410
    %v412 = vsel %vm44, %v366, 0.0
    %413 = vadd.xlane.f32.xlu0 %v412
    %v414 = vpop.xlane.xlu0 %413
    %v415 = vmul.f32 %v239, 0.025
    %v416 = vmul.f32 %v242, 0.025
    %v417 = vmul.f32 %v245, 0.025
    %v418 = vmul.f32 %v248, 0.025
    %v419 = vmul.f32 %v251, 0.025
    %v420 = vmul.f32 %v254, 0.025
    %v421 = vmul.f32 %v257, 0.025
    %v422 = vmul.f32 %v260, 0.025
    %v423 = vmul.f32 %v263, 0.025
    %v424 = vmul.f32 %v266, 0.025
    %v425 = vmul.f32 %v269, 0.025
    %v426 = vmul.f32 %v272, 0.025
    %v427 = vmul.f32 %v275, 0.025
    %v428 = vmul.f32 %v278, 0.025
    %v429 = vmul.f32 %v281, 0.025
    %v430 = vmul.f32 %v284, 0.025
    %v431 = vmul.f32 %v369, 0.875
    %v432 = vmul.f32 %v372, 0.875
    %v433 = vmul.f32 %v375, 0.875
    %v434 = vmul.f32 %v378, 0.875
    %v435 = vmul.f32 %v381, 0.875
    %v436 = vmul.f32 %v384, 0.875
    %v437 = vmul.f32 %v387, 0.875
    %v438 = vmul.f32 %v390, 0.875
    %v439 = vmul.f32 %v393, 0.875
    %v440 = vmul.f32 %v396, 0.875
    %v441 = vmul.f32 %v399, 0.875
    %v442 = vmul.f32 %v402, 0.875
    %v443 = vmul.f32 %v405, 0.875
    %v444 = vmul.f32 %v408, 0.875
    %v445 = vmul.f32 %v411, 0.875
    %v446 = vmul.f32 %v414, 0.875
    %v447 = vadd.f32 %v415, %v431
    %v448 = vadd.f32 %v416, %v432
    %v449 = vadd.f32 %v417, %v433
    %v450 = vadd.f32 %v418, %v434
    %v451 = vadd.f32 %v419, %v435
    %v452 = vadd.f32 %v420, %v436
    %v453 = vadd.f32 %v421, %v437
    %v454 = vadd.f32 %v422, %v438
    %v455 = vadd.f32 %v423, %v439
    %v456 = vadd.f32 %v424, %v440
    %v457 = vadd.f32 %v425, %v441
    %v458 = vadd.f32 %v426, %v442
    %v459 = vadd.f32 %v427, %v443
    %v460 = vadd.f32 %v428, %v444
    %v461 = vadd.f32 %v429, %v445
    %v462 = vadd.f32 %v430, %v446
    %v463 = vsub.f32 %v221, %v447
    %v464 = vsub.f32 %v222, %v448
    %v465 = vsub.f32 %v223, %v449
    %v466 = vsub.f32 %v224, %v450
    %v467 = vsub.f32 %v225, %v451
    %v468 = vsub.f32 %v226, %v452
    %v469 = vsub.f32 %v227, %v453
    %v470 = vsub.f32 %v228, %v454
    %v471 = vsub.f32 %v229, %v455
    %v472 = vsub.f32 %v230, %v456
    %v473 = vsub.f32 %v231, %v457
    %v474 = vsub.f32 %v232, %v458
    %v475 = vsub.f32 %v233, %v459
    %v476 = vsub.f32 %v234, %v460
    %v477 = vsub.f32 %v235, %v461
    %v478 = vsub.f32 %v236, %v462
    %s479 = smul.u32 0, 128
    %v480 = vlaneseq
    %v481 = vshrl.u32 %v480, 7
    %v482 = vadd.s32 %v481, 8
    %v483 = vadd.s32 %v481, 16
    %v484 = vadd.s32 %v481, 24
    %v485 = vadd.s32 %v481, 32
    %v486 = vadd.s32 %v481, 40
    %v487 = vadd.s32 %v481, 48
    %v488 = vadd.s32 %v481, 56
    %v489 = vadd.s32 %v481, 64
    %v490 = vadd.s32 %v481, 72
    %v491 = vadd.s32 %v481, 80
    %v492 = vadd.s32 %v481, 88
    %v493 = vadd.s32 %v481, 96
    %v494 = vadd.s32 %v481, 104
    %v495 = vadd.s32 %v481, 112
    %v496 = vadd.s32 %v481, 120
    %v497 = vstv %s479
    %v498 = vadd.s32 %v497, %v481
    %v499 = vadd.s32 %v497, %v482
    %v500 = vadd.s32 %v497, %v483
    %v501 = vadd.s32 %v497, %v484
    %v502 = vadd.s32 %v497, %v485
    %v503 = vadd.s32 %v497, %v486
    %v504 = vadd.s32 %v497, %v487
    %v505 = vadd.s32 %v497, %v488
    %v506 = vadd.s32 %v497, %v489
    %v507 = vadd.s32 %v497, %v490
    %v508 = vadd.s32 %v497, %v491
    %v509 = vadd.s32 %v497, %v492
    %v510 = vadd.s32 %v497, %v493
    %v511 = vadd.s32 %v497, %v494
    %v512 = vadd.s32 %v497, %v495
    %v513 = vadd.s32 %v497, %v496
    %vm514 = vcmp.lt.s32.totalorder %v498, 8
    %vm515 = vcmp.lt.s32.totalorder %v499, 8
    %vm516 = vcmp.lt.s32.totalorder %v500, 8
    %vm517 = vcmp.lt.s32.totalorder %v501, 8
    %vm518 = vcmp.lt.s32.totalorder %v502, 8
    %vm519 = vcmp.lt.s32.totalorder %v503, 8
    %vm520 = vcmp.lt.s32.totalorder %v504, 8
    %vm521 = vcmp.lt.s32.totalorder %v505, 8
    %vm522 = vcmp.lt.s32.totalorder %v506, 8
    %vm523 = vcmp.lt.s32.totalorder %v507, 8
    %vm524 = vcmp.lt.s32.totalorder %v508, 8
    %vm525 = vcmp.lt.s32.totalorder %v509, 8
    %vm526 = vcmp.lt.s32.totalorder %v510, 8
    %vm527 = vcmp.lt.s32.totalorder %v511, 8
    %vm528 = vcmp.lt.s32.totalorder %v512, 8
    %vm529 = vcmp.lt.s32.totalorder %v513, 8
    %v530 = vsel %vm514, %v463, 0.0
    %v531 = vsel %vm515, %v464, 0.0
    %v532 = vsel %vm516, %v465, 0.0
    %v533 = vsel %vm517, %v466, 0.0
    %v534 = vsel %vm518, %v467, 0.0
    %v535 = vsel %vm519, %v468, 0.0
    %v536 = vsel %vm520, %v469, 0.0
    %v537 = vsel %vm521, %v470, 0.0
    %v538 = vsel %vm522, %v471, 0.0
    %v539 = vsel %vm523, %v472, 0.0
    %v540 = vsel %vm524, %v473, 0.0
    %v541 = vsel %vm525, %v474, 0.0
    %v542 = vsel %vm526, %v475, 0.0
    %v543 = vsel %vm527, %v476, 0.0
    %v544 = vsel %vm528, %v477, 0.0
    %v545 = vsel %vm529, %v478, 0.0
    %vm546 = vcmask 7168
    %v547 = vsel %vm546, %v530, 0.0
    %v548 = vsel %vm546, %v531, 0.0
    %v549 = vadd.f32 %v547, %v548
    %v550 = vsel %vm546, %v532, 0.0
    %v551 = vadd.f32 %v549, %v550
    %v552 = vsel %vm546, %v533, 0.0
    %v553 = vadd.f32 %v551, %v552
    %v554 = vsel %vm546, %v534, 0.0
    %v555 = vadd.f32 %v553, %v554
    %v556 = vsel %vm546, %v535, 0.0
    %v557 = vadd.f32 %v555, %v556
    %v558 = vsel %vm546, %v536, 0.0
    %v559 = vadd.f32 %v557, %v558
    %v560 = vsel %vm546, %v537, 0.0
    %v561 = vadd.f32 %v559, %v560
    %v562 = vsel %vm546, %v538, 0.0
    %v563 = vadd.f32 %v561, %v562
    %v564 = vsel %vm546, %v539, 0.0
    %v565 = vadd.f32 %v563, %v564
    %v566 = vsel %vm546, %v540, 0.0
    %v567 = vadd.f32 %v565, %v566
    %v568 = vsel %vm546, %v541, 0.0
    %v569 = vadd.f32 %v567, %v568
    %v570 = vsel %vm546, %v542, 0.0
    %v571 = vadd.f32 %v569, %v570
    %v572 = vsel %vm546, %v543, 0.0
    %v573 = vadd.f32 %v571, %v572
    %v574 = vsel %vm546, %v544, 0.0
    %v575 = vadd.f32 %v573, %v574
    %v576 = vsel %vm546, %v545, 0.0
    %v577 = vadd.f32 %v575, %v576
    %578 = vadd.xlane.f32.xlu0 %v577
    %v579 = vpop.xlane.xlu0 %578
    %v580 = vrot.slane %v579, 4
    %v581 = vadd.f32 %v579, %v580
    %v582 = vrot.slane %v581, 2
    %v583 = vadd.f32 %v581, %v582
    %v584 = vrot.slane %v583, 1
    %v585 = vadd.f32 %v583, %v584
    %s586 = vtos %v585
    %s587 = scalar_lea.smem [#allocation2], 0
    %588 = sst [smem:[%s587]] %s586
    // Predicated region
    $region10: #{tpu_custom_call.1} parent=1 // pred_check
      _
    $region11: #{tpu_custom_call.1} parent=1 // pred_check_branch
      %590 = sbr.rel (0) target = $region13
    $region12: #{tpu_custom_call.1} parent=1 // pred_region
      %s592 = ssub.s32 16, 16
      %593 = vsyncadd [#allocation3], %s592
      %596 = dma.smem_to_hbm [#allocation2], 16, %s2, [#allocation3]
    $region13: #{tpu_custom_call.1} parent=1 // pred_fallthru
      _
    // Predicated region
    $region14: #{tpu_custom_call.1} parent=1 // pred_check
      _
    $region15: #{tpu_custom_call.1} parent=1 // pred_check_branch
      %598 = sbr.rel (0) target = $region17
    $region16: #{tpu_custom_call.1} parent=1 // pred_region
      %599 = dma.done [#allocation3], 16
    $region17: #{tpu_custom_call.1} parent=1 // pred_fallthru
      _
    %600 = sfence
    %601 = vsyncpa [#allocation3], 1

</llo_original>
